<compile_context>
chip_gen: v5e
topology: v5e:2x2
jax: 0.10.0
libtpu: 0.0.40
codegen_flags: <defaults>
</compile_context>

<pallas_src>
import functools

import jax
import jax.numpy as jnp
from jax import lax
from jax.experimental import pallas as pl
from jax.experimental.pallas import tpu as pltpu


def _layernorm_kernel(x_ref, gamma_ref, beta_ref, o_ref, *, eps):
    # x_ref: (C, tile_t) -- channels on sublanes, time on lanes.
    # gamma_ref / beta_ref: (C, 1) -- broadcast along the lane (time) axis.
    x = x_ref[...].astype(jnp.float32)
    mean = jnp.mean(x, axis=0, keepdims=True)             # sublane reduce (XLU)
    centered = x - mean
    var = jnp.mean(centered * centered, axis=0, keepdims=True)
    inv = lax.rsqrt(var + eps)                             # EUP slot
    g = gamma_ref[...].astype(jnp.float32)
    b = beta_ref[...].astype(jnp.float32)
    o_ref[...] = (centered * inv * g + b).astype(o_ref.dtype)


def _vmem_capacity_bytes():
    # Generation-aware VMEM size; conservative (v7x) fallback if the query is
    # unavailable (e.g. interpret mode / old jax).
    try:
        info = pltpu.get_tpu_info()
        cap = int(getattr(info, "vmem_capacity_bytes", 64 << 20))
        return max(cap, 32 << 20)
    except Exception:
        return 64 << 20


def _choose_tile_t(B, T, C, itemsize, budget_bytes):
    # Live VMEM ~= 2 (double buffer) x (input tile + output tile)
    #           = 4 * C * tile_t * itemsize   (gamma/beta are negligible).
    max_tile = budget_bytes // (4 * C * itemsize)
    max_tile = max(128, (max_tile // 128) * 128)

    # Aim for >= ~8 total grid steps so DMA-in / compute / DMA-out overlap and
    # the v7x megacore has >= 2 blocks to shard even at B = 1.
    min_total_steps = 8
    time_steps = max(1, -(-min_total_steps // max(B, 1)))   # ceil(8 / B)
    tile_for_steps = -(-T // time_steps)                     # ceil(T / steps)
    tile_for_steps = ((tile_for_steps + 127) // 128) * 128   # unmasked vst

    tile_t = min(max_tile, tile_for_steps)
    if tile_t >= T:
        # Single time tile per batch row: use the full extent (exempt from the
        # 128-lane divisibility rule), nothing masked at all.
        return T
    return max(128, tile_t)


def layer_norm_nct(x, gamma, beta, eps=1e-5, vmem_tile_budget_bytes=None):
    """x: (B, C, T); gamma, beta: (C,).  Returns (B, C, T).  Same semantics as
    the PyTorch LayerNorm module (normalization over the channel axis)."""
    B, C, T = x.shape
    itemsize = jnp.dtype(x.dtype).itemsize

    vmem_capacity = _vmem_capacity_bytes()
    if vmem_tile_budget_bytes is None:
        # ~16 MiB of live tiles on v7x (64 MiB VMEM), ~32 MiB on v5e/v6e.
        vmem_tile_budget_bytes = max(16 << 20, min(40 << 20, vmem_capacity // 4))

    tile_t = _choose_tile_t(B, T, C, itemsize, vmem_tile_budget_bytes)
    grid = (B, pl.cdiv(T, tile_t))

    gamma2d = gamma.reshape(C, 1).astype(jnp.float32)
    beta2d = beta.reshape(C, 1).astype(jnp.float32)

    # Scoped-VMEM request: tiles + params + headroom, capped below physical
    # VMEM with margin for compiler-internal scratch (48 MiB on v7x, ~96 MiB
    # on v5e/v6e).
    needed_vmem = 4 * C * tile_t * itemsize + 4 * C * 4 + (8 << 20)
    vmem_cap = max(32 << 20, min((vmem_capacity * 3) // 4, 100 << 20))
    vmem_limit = int(min(max(needed_vmem, 32 << 20), vmem_cap))

    cost = pl.CostEstimate(
        flops=8 * B * C * T,
        transcendentals=B * T,
        bytes_accessed=2 * B * C * T * itemsize + 2 * C * 4,
    )

    kernel = functools.partial(_layernorm_kernel, eps=float(eps))

    out = pl.pallas_call(
        kernel,
        out_shape=jax.ShapeDtypeStruct((B, C, T), x.dtype),
        grid_spec=pltpu.PrefetchScalarGridSpec(
            num_scalar_prefetch=0,
            grid=grid,
            in_specs=[
                # Batch dim squeezed (None); kernel sees (C, tile_t).
                pl.BlockSpec((None, C, tile_t), lambda b, t: (b, 0, t)),
                pl.BlockSpec((C, 1), lambda b, t: (0, 0)),
                pl.BlockSpec((C, 1), lambda b, t: (0, 0)),
            ],
            out_specs=pl.BlockSpec((None, C, tile_t), lambda b, t: (b, 0, t)),
        ),
        compiler_params=pltpu.CompilerParams(
            dimension_semantics=("parallel", "parallel"),
            vmem_limit_bytes=vmem_limit,
        ),
        cost_estimate=cost,
    )(x, gamma2d, beta2d)

    return out


def _reference(x, gamma, beta, eps=1e-5):
    # Pure-JAX reference mirroring F.layer_norm over the channel axis.
    xt = jnp.transpose(x, (0, 2, 1)).astype(jnp.float32)
    mean = jnp.mean(xt, axis=-1, keepdims=True)
    var = jnp.mean((xt - mean) ** 2, axis=-1, keepdims=True)
    y = (xt - mean) / jnp.sqrt(var + eps) * gamma + beta
    return jnp.transpose(y, (0, 2, 1)).astype(x.dtype)


if __name__ == "__main__":
    key = jax.random.PRNGKey(0)
    k_x, k_g, k_b, k_x2 = jax.random.split(key, 4)

    # Test 1: small shape, full-extent time tile (grid = (B, 1)).
    B, C, T = 2, 32, 16
    x = jax.random.normal(k_x, (B, C, T), dtype=jnp.float32)
    gamma = 1.0 + 0.1 * jax.random.normal(k_g, (C,), dtype=jnp.float32)
    beta = 0.1 * jax.random.normal(k_b, (C,), dtype=jnp.float32)

    out = jax.block_until_ready(layer_norm_nct(x, gamma, beta, eps=1e-5))
    ref = _reference(x, gamma, beta, eps=1e-5)
    assert out.shape == (B, C, T)
    assert jnp.allclose(out, ref, atol=1e-5, rtol=1e-5)

    # Test 2: force the tiled path with a ragged (masked) last time-tile:
    # tile_t = 128, grid = (2, cdiv(200, 128) = 2), no padding / slicing.
    # This also guards the invariant that garbage in out-of-bounds lanes is
    # harmless because the reduction is over channels (sublanes), not lanes.
    B2, C2, T2 = 2, 32, 200
    x2 = jax.random.normal(k_x2, (B2, C2, T2), dtype=jnp.float32)
    out2 = jax.block_until_ready(
        layer_norm_nct(x2, gamma, beta, eps=1e-5,
                       vmem_tile_budget_bytes=64 * 1024))
    ref2 = _reference(x2, gamma, beta, eps=1e-5)
    assert out2.shape == (B2, C2, T2)
    assert jnp.allclose(out2, ref2, atol=1e-5, rtol=1e-5)

    print("KERNEL_OK")
</pallas_src>

<mosaic_0001>
module attributes {stable_mosaic.version = 11 : i64} {
  func.func @_layernorm_kernel(%arg0: i32, %arg1: i32, %arg2: memref<1x32x16xf32, #tpu.memory_space<vmem>>, %arg3: memref<32x1xf32, #tpu.memory_space<vmem>>, %arg4: memref<32x1xf32, #tpu.memory_space<vmem>>, %arg5: memref<1x32x16xf32, #tpu.memory_space<vmem>>) attributes {dimension_semantics = [#tpu.dimension_semantics<parallel>, #tpu.dimension_semantics<parallel>], iteration_bounds = array<i64: 2, 1>, scalar_prefetch = 0 : i64, scratch_operands = 0 : i64, tpu.core_type = #tpu.core_type<tc>, window_params = [{transform_indices = @transform_0, window_bounds = array<i64: 1, 32, 16>}, {pipeline_mode = #tpu.pipeline_mode<synchronous>, transform_indices = @transform_1, window_bounds = array<i64: 32, 1>}, {pipeline_mode = #tpu.pipeline_mode<synchronous>, transform_indices = @transform_2, window_bounds = array<i64: 32, 1>}, {transform_indices = @transform_3, window_bounds = array<i64: 1, 32, 16>}]} {
    %c0 = arith.constant 0 : index
    %c0_0 = arith.constant 0 : index
    %c0_1 = arith.constant 0 : index
    %0 = vector.load %arg2[%c0, %c0_0, %c0_1] : memref<1x32x16xf32, #tpu.memory_space<vmem>>, vector<1x32x16xf32>
    %1 = vector.shape_cast %0 : vector<1x32x16xf32> to vector<32x16xf32>
    %cst = arith.constant dense<0.000000e+00> : vector<16xf32>
    %2 = vector.multi_reduction <add>, %1, %cst [0] : vector<32x16xf32> to vector<16xf32>
    %3 = vector.shape_cast %2 : vector<16xf32> to vector<1x16xf32>
    %cst_2 = arith.constant 3.200000e+01 : f32
    %4 = vector.broadcast %cst_2 : f32 to vector<1x16xf32>
    %5 = arith.divf %3, %4 : vector<1x16xf32>
    %6 = vector.broadcast %5 : vector<1x16xf32> to vector<32x16xf32>
    %7 = arith.subf %1, %6 : vector<32x16xf32>
    %8 = arith.mulf %7, %7 : vector<32x16xf32>
    %cst_3 = arith.constant dense<0.000000e+00> : vector<16xf32>
    %9 = vector.multi_reduction <add>, %8, %cst_3 [0] : vector<32x16xf32> to vector<16xf32>
    %10 = vector.shape_cast %9 : vector<16xf32> to vector<1x16xf32>
    %cst_4 = arith.constant 3.200000e+01 : f32
    %11 = vector.broadcast %cst_4 : f32 to vector<1x16xf32>
    %12 = arith.divf %10, %11 : vector<1x16xf32>
    %cst_5 = arith.constant 9.99999974E-6 : f32
    %13 = vector.broadcast %cst_5 : f32 to vector<1x16xf32>
    %14 = arith.addf %12, %13 : vector<1x16xf32>
    %15 = math.rsqrt %14 : vector<1x16xf32>
    %c0_6 = arith.constant 0 : index
    %c0_7 = arith.constant 0 : index
    %16 = vector.load %arg3[%c0_6, %c0_7] : memref<32x1xf32, #tpu.memory_space<vmem>>, vector<32x1xf32>
    %c0_8 = arith.constant 0 : index
    %c0_9 = arith.constant 0 : index
    %17 = vector.load %arg4[%c0_8, %c0_9] : memref<32x1xf32, #tpu.memory_space<vmem>>, vector<32x1xf32>
    %18 = vector.broadcast %15 : vector<1x16xf32> to vector<32x16xf32>
    %19 = arith.mulf %7, %18 : vector<32x16xf32>
    %20 = vector.broadcast %16 : vector<32x1xf32> to vector<32x16xf32>
    %21 = arith.mulf %19, %20 : vector<32x16xf32>
    %22 = vector.broadcast %17 : vector<32x1xf32> to vector<32x16xf32>
    %23 = arith.addf %21, %22 : vector<32x16xf32>
    %c0_10 = arith.constant 0 : index
    %c0_11 = arith.constant 0 : index
    %c0_12 = arith.constant 0 : index
    %24 = vector.load %arg5[%c0_10, %c0_11, %c0_12] : memref<1x32x16xf32, #tpu.memory_space<vmem>>, vector<1x32x16xf32>
    %25 = vector.shape_cast %24 : vector<1x32x16xf32> to vector<32x16xf32>
    %26 = vector.shape_cast %23 : vector<32x16xf32> to vector<1x32x16xf32>
    tpu.vector_store %arg5[%c0_10, %c0_11, %c0_12], %26 {strides = array<i32>} : memref<1x32x16xf32, #tpu.memory_space<vmem>>, vector<1x32x16xf32>,
    return
  }
  func.func @transform_0(%arg0: i32, %arg1: i32) -> (i32, i32, i32) {
    %c0_i32 = arith.constant 0 : i32
    %c0_i32_0 = arith.constant 0 : i32
    return %arg0, %c0_i32, %arg1 : i32, i32, i32
  }
  func.func @transform_1(%arg0: i32, %arg1: i32) -> (i32, i32) {
    %c0_i32 = arith.constant 0 : i32
    %c0_i32_0 = arith.constant 0 : i32
    %c0_i32_1 = arith.constant 0 : i32
    return %c0_i32, %c0_i32_0 : i32, i32
  }
  func.func @transform_2(%arg0: i32, %arg1: i32) -> (i32, i32) {
    %c0_i32 = arith.constant 0 : i32
    %c0_i32_0 = arith.constant 0 : i32
    %c0_i32_1 = arith.constant 0 : i32
    return %c0_i32, %c0_i32_0 : i32, i32
  }
  func.func @transform_3(%arg0: i32, %arg1: i32) -> (i32, i32, i32) {
    %c0_i32 = arith.constant 0 : i32
    %c0_i32_0 = arith.constant 0 : i32
    return %arg0, %c0_i32, %arg1 : i32, i32, i32
  }
}

</mosaic_0001>

<llo_original>
// kernel: tpu_custom_call.1
$region0: #{tpu_custom_call.1}
  #allocation0 [shape = 'u32[]', space=smem, size = 0x4, offset = 0x4, fixed_abs, tag = 'smem constant byte address 0x4 - core index']
  #allocation1 [shape = 'u32[72,128]{1,0:T(1,128)}', space=vmem, size = 0x9000, scoped, tag = 'internal scratch']
  %s0 = inlined_call_operand.vmem [shape: f32[2,32,16], index: 0, kind: input, shape index: {}]
  %s1 = inlined_call_operand.vmem [shape: f32[32,1], index: 1, kind: input, shape index: {}]
  %s2 = inlined_call_operand.vmem [shape: f32[32,1], index: 2, kind: input, shape index: {}]
  %s3 = inlined_call_operand.vmem [shape: f32[2,32,16], index: 3, kind: output, shape index: {}]
  %s4 = sld [smem:[#allocation0]]
  $region45: #{tpu_custom_call.1} parent=0
    _
  %s6 = ssub.s32 1, %s4
  %s7 = scalar_select 0, %s6, %s4
  loop: start=0, step=1, limit=4
  $region2: #{tpu_custom_call.1} parent=0 // loop_pre_header
    _
  $region3: #{tpu_custom_call.1} parent=0 // loop_header
    %s9 = sphi 0, %s13
    %p10 = scmp.ge.s32.totalorder %s9, 4
    %s16 = sphi 0, %s28
    %s17 = sphi 0, %s24
    %s18 = sphi 0, %s16
    %s19 = sphi 0, %s17
    %s20 = sphi 0, %s18
    %s21 = sphi 0, %s19
    %s33 = sphi 0, %s35
    %s36 = sphi 0, %s33
    %s37 = sphi 0, %s36
    %s53 = sphi 0, %s37
    %s57 = sphi 0, %s57
    %s59 = sphi 0, %s57
    %s60 = sphi 0, %s59
    %s74 = sphi 0, %s60
    %s78 = sphi 0, %s78
    %s80 = sphi 0, %s78
    %s81 = sphi 0, %s80
    %s95 = sphi 0, %s81
    %s103 = sphi 0, %s105
    %s106 = sphi 0, %s103
    %s107 = sphi 0, %s106
    %s123 = sphi 0, %s107
  $region4: #{tpu_custom_call.1} parent=0 // loop_header_branch
    %12 = sbr.rel (%p10) target = $region8
  $region5: #{tpu_custom_call.1} parent=0 // loop_body
    %s14 = ssub.s32 %s9, 1
    %s15 = ssub.s32 %s9, 2
    %s22 = sadd.s32 1, %s17
    %p23 = scmp.ge.s32.totalorder %s22, 1
    %s24 = scalar_select %p23, 0, %s22
    %s25 = sadd.s32 1, %s16
    %s26 = scalar_select %p23, %s25, %s16
    %p27 = scmp.ge.s32.totalorder %s26, 2
    %s28 = scalar_select %p27, 0, %s26
    %s29 = ssub.s32 %s16, %s28
    %s30 = ssub.s32 %s17, %s24
    %s31 = sor.u32 %s29, %s30
    %p32 = scmp.eq.s32.totalorder %s31, 0
    %s34 = sadd.s32 %s33, 1
    %s35 = scalar_select %p32, %s33, %s34
    %p38 = pneg %p32
    %p39 = scmp.eq.s32.totalorder %s9, 1
    %p40 = por %p38, %p39
    %p41 = scmp.ne.s32.totalorder %s33, %s36
    %p42 = scmp.eq.s32.totalorder %s9, 0
    %p43 = por %p41, %p42
    %p44 = scmp.ne.s32.totalorder %s33, %s36
    %p45 = scmp.eq.s32.totalorder %s14, 1
    %p46 = por %p44, %p45
    %p47 = scmp.ne.s32.totalorder %s36, %s37
    %p48 = scmp.eq.s32.totalorder %s14, 0
    %p49 = por %p47, %p48
    %p50 = scmp.ne.s32.totalorder %s36, %s37
    %p51 = scmp.eq.s32.totalorder %s15, 1
    %p52 = por %p50, %p51
    %p54 = scmp.ne.s32.totalorder %s37, %s53
    %p55 = scmp.eq.s32.totalorder %s15, 0
    %p56 = por %p54, %p55
    %s58 = sadd.s32 %s57, 1
    %p61 = scmp.eq.s32.totalorder %s9, 1
    %p62 = scmp.ne.s32.totalorder %s57, %s59
    %p63 = scmp.eq.s32.totalorder %s9, 0
    %p64 = por %p62, %p63
    %p65 = scmp.ne.s32.totalorder %s57, %s59
    %p66 = scmp.eq.s32.totalorder %s14, 1
    %p67 = por %p65, %p66
    %p68 = scmp.ne.s32.totalorder %s59, %s60
    %p69 = scmp.eq.s32.totalorder %s14, 0
    %p70 = por %p68, %p69
    %p71 = scmp.ne.s32.totalorder %s59, %s60
    %p72 = scmp.eq.s32.totalorder %s15, 1
    %p73 = por %p71, %p72
    %p75 = scmp.ne.s32.totalorder %s60, %s74
    %p76 = scmp.eq.s32.totalorder %s15, 0
    %p77 = por %p75, %p76
    %s79 = sadd.s32 %s78, 1
    %p82 = scmp.eq.s32.totalorder %s9, 1
    %p83 = scmp.ne.s32.totalorder %s78, %s80
    %p84 = scmp.eq.s32.totalorder %s9, 0
    %p85 = por %p83, %p84
    %p86 = scmp.ne.s32.totalorder %s78, %s80
    %p87 = scmp.eq.s32.totalorder %s14, 1
    %p88 = por %p86, %p87
    %p89 = scmp.ne.s32.totalorder %s80, %s81
    %p90 = scmp.eq.s32.totalorder %s14, 0
    %p91 = por %p89, %p90
    %p92 = scmp.ne.s32.totalorder %s80, %s81
    %p93 = scmp.eq.s32.totalorder %s15, 1
    %p94 = por %p92, %p93
    %p96 = scmp.ne.s32.totalorder %s81, %s95
    %p97 = scmp.eq.s32.totalorder %s15, 0
    %p98 = por %p96, %p97
    %s99 = ssub.s32 %s16, %s28
    %s100 = ssub.s32 %s17, %s24
    %s101 = sor.u32 %s99, %s100
    %p102 = scmp.eq.s32.totalorder %s101, 0
    %s104 = sadd.s32 %s103, 1
    %s105 = scalar_select %p102, %s103, %s104
    %p108 = pneg %p102
    %p109 = scmp.eq.s32.totalorder %s9, 1
    %p110 = por %p108, %p109
    %p111 = scmp.ne.s32.totalorder %s103, %s106
    %p112 = scmp.eq.s32.totalorder %s9, 0
    %p113 = por %p111, %p112
    %p114 = scmp.ne.s32.totalorder %s103, %s106
    %p115 = scmp.eq.s32.totalorder %s14, 1
    %p116 = por %p114, %p115
    %p117 = scmp.ne.s32.totalorder %s106, %s107
    %p118 = scmp.eq.s32.totalorder %s14, 0
    %p119 = por %p117, %p118
    %p120 = scmp.ne.s32.totalorder %s106, %s107
    %p121 = scmp.eq.s32.totalorder %s15, 1
    %p122 = por %p120, %p121
    %p124 = scmp.ne.s32.totalorder %s107, %s123
    %p125 = scmp.eq.s32.totalorder %s15, 0
    %p126 = por %p124, %p125
    %p127 = scmp.le.s32.totalorder 1, %s9
    %p128 = scmp.lt.s32.totalorder %s9, 3
    %p129 = pnand %p127, %p128
    %p130 = pneg %p129
    // Predicated region
    $region9: #{tpu_custom_call.1} parent=5 // pred_check
      _
    $region10: #{tpu_custom_call.1} parent=5 // pred_check_branch
      %132 = sbr.rel (%p129) target = $region12
    $region11: #{tpu_custom_call.1} parent=5 // pred_region
      %s133 = ssub.s32 %s9, 1
      // Predicated region
      $region13: #{tpu_custom_call.1} parent=11 // pred_check
        %p134 = pneg %p70
      $region14: #{tpu_custom_call.1} parent=11 // pred_check_branch
        %136 = sbr.rel (%p134) target = $region16
      $region15: #{tpu_custom_call.1} parent=11 // pred_region
        _
      $region16: #{tpu_custom_call.1} parent=11 // pred_fallthru
        _
      // Predicated region
      $region17: #{tpu_custom_call.1} parent=11 // pred_check
        %p137 = pneg %p91
      $region18: #{tpu_custom_call.1} parent=11 // pred_check_branch
        %139 = sbr.rel (%p137) target = $region20
      $region19: #{tpu_custom_call.1} parent=11 // pred_region
        _
      $region20: #{tpu_custom_call.1} parent=11 // pred_fallthru
        _
    $region12: #{tpu_custom_call.1} parent=5 // pred_fallthru
      _
    %p140 = scmp.lt.s32.totalorder %s9, 2
    // Predicated region
    $region21: #{tpu_custom_call.1} parent=5 // pred_check
      %p141 = pneg %p140
    $region22: #{tpu_custom_call.1} parent=5 // pred_check_branch
      %143 = sbr.rel (%p141) target = $region24
    $region23: #{tpu_custom_call.1} parent=5 // pred_region
      // Predicated region
      $region25: #{tpu_custom_call.1} parent=23 // pred_check
        %p144 = pneg %p43
      $region26: #{tpu_custom_call.1} parent=23 // pred_check_branch
        %146 = sbr.rel (%p144) target = $region28
      $region27: #{tpu_custom_call.1} parent=23 // pred_region
        %p147 = scmp.lt.s32.totalorder %s16, 1
        %s148 = scalar_select %p147, %s16, 1
        %p149 = scmp.lt.s32.totalorder %s17, 0
        %s150 = scalar_select %p149, %s17, 0
        %s151 = smul.addr %s148, 4
        %s152 = sadd.s32 %s150, %s151
        %s153 = smul.addr %s152, 8
        %s154 = scalar_lea.vmem %s0, %s153
      $region28: #{tpu_custom_call.1} parent=23 // pred_fallthru
        _
    $region24: #{tpu_custom_call.1} parent=5 // pred_fallthru
      _
    %p155 = scmp.le.s32.totalorder 1, %s9
    %p156 = scmp.lt.s32.totalorder %s9, 3
    %p157 = pnand %p155, %p156
    %p158 = pneg %p157
    // Predicated region
    $region29: #{tpu_custom_call.1} parent=5 // pred_check
      _
    $region30: #{tpu_custom_call.1} parent=5 // pred_check_branch
      %160 = sbr.rel (%p157) target = $region32
    $region31: #{tpu_custom_call.1} parent=5 // pred_region
      %s161 = ssub.s32 %s9, 1
      %p162 = scmp.lt.s32.totalorder %s18, 1
      %s163 = scalar_select %p162, %s18, 1
      %p164 = scmp.lt.s32.totalorder %s19, 0
      %s165 = scalar_select %p164, %s19, 0
      %s166 = smul.addr %s163, 4
      %s167 = sadd.s32 %s165, %s166
      %s168 = smul.addr %s167, 8
      %s169 = scalar_lea.vmem %s0, %s168
      %p170 = pneg %p49
      %p171 = pneg %p46
      %p172 = pneg %p70
      %p173 = pneg %p67
      %p174 = pneg %p91
      %p175 = pneg %p88
      %p176 = pneg %p119
      %p177 = pneg %p116
      %p178 = scmp.lt.s32.totalorder %s18, 1
      %s179 = scalar_select %p178, %s18, 1
      %p180 = scmp.lt.s32.totalorder %s19, 0
      %s181 = scalar_select %p180, %s19, 0
      %s182 = smul.addr %s179, 4
      %s183 = sadd.s32 %s181, %s182
      %s184 = smul.addr %s183, 8
      %s185 = scalar_lea.vmem %s3, %s184
      %p186 = scmp.lt.s32.totalorder %s18, 1
      %s187 = scalar_select %p186, %s18, 1
      %p188 = scmp.lt.s32.totalorder %s19, 0
      %s189 = scalar_select %p188, %s19, 0
      %s190 = smul.addr %s187, 4
      %s191 = sadd.s32 %s189, %s190
      %s192 = smul.addr %s191, 8
      %s193 = scalar_lea.vmem %s0, %s192
      %p194 = scmp.lt.s32.totalorder %s18, 1
      %s195 = scalar_select %p194, %s18, 1
      %p196 = scmp.lt.s32.totalorder %s19, 0
      %s197 = scalar_select %p196, %s19, 0
      %s198 = smul.addr %s195, 4
      %s199 = sadd.s32 %s197, %s198
      %s200 = smul.addr %s199, 8
      %s201 = scalar_lea.vmem %s3, %s200
      %v202 = vld [vmem:[%s193] sm:$0xff]
      %v203 = vld [vmem:[%s193 + $0x8] sm:$0xff]
      %v204 = vld [vmem:[%s193 + $0x10] sm:$0xff]
      %v205 = vld [vmem:[%s193 + $0x18] sm:$0xff]
      %vm206 = vcmask 130048
      %v207 = vsel %vm206, %v202, 0.0
      %v208 = vsel %vm206, %v203, 0.0
      %v209 = vadd.f32 %v207, %v208
      %v210 = vsel %vm206, %v204, 0.0
      %v211 = vadd.f32 %v209, %v210
      %v212 = vsel %vm206, %v205, 0.0
      %v213 = vadd.f32 %v211, %v212
      %v214 = vrot.slane %v213, 4
      %v215 = vadd.f32 %v213, %v214
      %v216 = vrot.slane %v215, 2
      %v217 = vadd.f32 %v215, %v216
      %v218 = vrot.slane %v217, 1
      %v219 = vadd.f32 %v217, %v218
      %v220 = vrcp.pop 32.0
      %v221 = vmul.f32 32.0, %v220
      %v222 = vsub.f32 1.0, %v221
      %v223 = vmul.f32 %v220, %v222
      %v224 = vadd.f32 %v220, %v223
      %vm225 = vweird.f32 %v220
      %v226 = vsel %vm225, %v220, %v224
      %v227 = vmul.f32 %v219, %v226
      %v228 = vsub.f32 %v202, %v227
      %v229 = vsub.f32 %v203, %v227
      %v230 = vsub.f32 %v204, %v227
      %v231 = vsub.f32 %v205, %v227
      %v232 = vmul.f32 %v228, %v228
      %v233 = vmul.f32 %v229, %v229
      %v234 = vmul.f32 %v230, %v230
      %v235 = vmul.f32 %v231, %v231
      %v236 = vsel %vm206, %v232, 0.0
      %v237 = vsel %vm206, %v233, 0.0
      %v238 = vadd.f32 %v236, %v237
      %v239 = vsel %vm206, %v234, 0.0
      %v240 = vadd.f32 %v238, %v239
      %v241 = vsel %vm206, %v235, 0.0
      %v242 = vadd.f32 %v240, %v241
      %v243 = vrot.slane %v242, 4
      %v244 = vadd.f32 %v242, %v243
      %v245 = vrot.slane %v244, 2
      %v246 = vadd.f32 %v244, %v245
      %v247 = vrot.slane %v246, 1
      %v248 = vadd.f32 %v246, %v247
      %v249 = vmul.f32 %v248, %v226
      %v250 = vadd.f32 %v249, 1e-05
      %v251 = vrsqrt.pop %v250
      %v252 = vmul.f32 %v251, %v250
      %v253 = vmul.f32 %v252, %v251
      %v254 = vmul.f32 0.5, %v253
      %v255 = vsub.f32 1.5, %v254
      %v256 = vmul.f32 %v251, %v255
      %vm257 = vweird.f32 %v250
      %vm258 = vweird.f32 %v251
      %vm259 = vmor %vm257, %vm258
      %v260 = vsel %vm259, %v251, %v256
      %v261 = vld [vmem:[%s1] sm:$0xff]
      %v262 = vld [vmem:[%s1 + $0x8] sm:$0xff]
      %v263 = vld [vmem:[%s1 + $0x10] sm:$0xff]
      %v264 = vld [vmem:[%s1 + $0x18] sm:$0xff]
      %v265 = vld [vmem:[%s2] sm:$0xff]
      %v266 = vld [vmem:[%s2 + $0x8] sm:$0xff]
      %v267 = vld [vmem:[%s2 + $0x10] sm:$0xff]
      %v268 = vld [vmem:[%s2 + $0x18] sm:$0xff]
      %v269 = vmul.f32 %v228, %v260
      %v270 = vmul.f32 %v229, %v260
      %v271 = vmul.f32 %v230, %v260
      %v272 = vmul.f32 %v231, %v260
      %274 = vset.pattern.permute.xlu0 0
      %275 = vperm.xlu0 %274, %v261
      %v276 = vpop.permute.xlu0 %275
      %279 = vset.pattern.permute.xlu0 0
      %280 = vperm.xlu0 %279, %v262
      %v281 = vpop.permute.xlu0 %280
      %284 = vset.pattern.permute.xlu0 0
      %285 = vperm.xlu0 %284, %v263
      %v286 = vpop.permute.xlu0 %285
      %289 = vset.pattern.permute.xlu0 0
      %290 = vperm.xlu0 %289, %v264
      %v291 = vpop.permute.xlu0 %290
      %v293 = vmul.f32 %v269, %v276
      %v294 = vmul.f32 %v270, %v281
      %v295 = vmul.f32 %v271, %v286
      %v296 = vmul.f32 %v272, %v291
      %298 = vset.pattern.permute.xlu0 0
      %299 = vperm.xlu0 %298, %v265
      %v300 = vpop.permute.xlu0 %299
      %303 = vset.pattern.permute.xlu0 0
      %304 = vperm.xlu0 %303, %v266
      %v305 = vpop.permute.xlu0 %304
      %308 = vset.pattern.permute.xlu0 0
      %309 = vperm.xlu0 %308, %v267
      %v310 = vpop.permute.xlu0 %309
      %313 = vset.pattern.permute.xlu0 0
      %314 = vperm.xlu0 %313, %v268
      %v315 = vpop.permute.xlu0 %314
      %v317 = vadd.f32 %v293, %v300
      %v318 = vadd.f32 %v294, %v305
      %v319 = vadd.f32 %v295, %v310
      %v320 = vadd.f32 %v296, %v315
      %321 = vst.msk [vmem:[%s201] sm:$0xff] %vm206, %v317
      %322 = vst.msk [vmem:[%s201 + $0x8] sm:$0xff] %vm206, %v318
      %323 = vst.msk [vmem:[%s201 + $0x10] sm:$0xff] %vm206, %v319
      %324 = vst.msk [vmem:[%s201 + $0x18] sm:$0xff] %vm206, %v320
      %p325 = scmp.lt.s32.totalorder %s18, 1
      %s326 = scalar_select %p325, %s18, 1
      %p327 = scmp.lt.s32.totalorder %s19, 0
      %s328 = scalar_select %p327, %s19, 0
      %s329 = smul.addr %s326, 4
      %s330 = sadd.s32 %s328, %s329
      %s331 = smul.addr %s330, 8
      %s332 = scalar_lea.vmem %s3, %s331
      // Predicated region
      $region33: #{tpu_custom_call.1} parent=31 // pred_check
        %p333 = pneg %p116
      $region34: #{tpu_custom_call.1} parent=31 // pred_check_branch
        %335 = sbr.rel (%p333) target = $region36
      $region35: #{tpu_custom_call.1} parent=31 // pred_region
        _
      $region36: #{tpu_custom_call.1} parent=31 // pred_fallthru
        _
    $region32: #{tpu_custom_call.1} parent=5 // pred_fallthru
      _
    %p336 = scmp.le.s32.totalorder 2, %s9
    // Predicated region
    $region37: #{tpu_custom_call.1} parent=5 // pred_check
      %p337 = pneg %p336
    $region38: #{tpu_custom_call.1} parent=5 // pred_check_branch
      %339 = sbr.rel (%p337) target = $region40
    $region39: #{tpu_custom_call.1} parent=5 // pred_region
      %s340 = ssub.s32 %s9, 2
      // Predicated region
      $region41: #{tpu_custom_call.1} parent=39 // pred_check
        %p341 = pneg %p122
      $region42: #{tpu_custom_call.1} parent=39 // pred_check_branch
        %343 = sbr.rel (%p341) target = $region44
      $region43: #{tpu_custom_call.1} parent=39 // pred_region
        %p344 = scmp.lt.s32.totalorder %s20, 1
        %s345 = scalar_select %p344, %s20, 1
        %p346 = scmp.lt.s32.totalorder %s21, 0
        %s347 = scalar_select %p346, %s21, 0
        %s348 = smul.addr %s345, 4
        %s349 = sadd.s32 %s347, %s348
        %s350 = smul.addr %s349, 8
        %s351 = scalar_lea.vmem %s3, %s350
      $region44: #{tpu_custom_call.1} parent=39 // pred_fallthru
        _
    $region40: #{tpu_custom_call.1} parent=5 // pred_fallthru
      _
  $region6: #{tpu_custom_call.1} parent=0 // loop_footer
    %s13 = sadd.s32 1, %s9
  $region7: #{tpu_custom_call.1} parent=0 // loop_footer_branch
    %8 = sbr.rel target = $region3
  $region8: #{tpu_custom_call.1} parent=0 // loop_exit
    _

</llo_original>
